<compile_context>
chip_gen: v7x
topology: tpu7x:2x2x1
jax: 0.10.0
libtpu: 0.0.40
codegen_flags: <defaults>
</compile_context>

<pallas_src>
import functools

import jax
import jax.numpy as jnp
from jax.experimental import pallas as pl
from jax.experimental.pallas import tpu as pltpu


def conv3x3_kernel(x_ref, w_ref, b_ref, mask_ref, o_ref, *, W):
    """3x3 conv (implicit zero padding) on a lane-folded block of whole images.

    x_ref:    (Cin, Nblk)    f32   Nblk = Bt * H * W (Bt whole images on lanes)
    w_ref:    (9, Cout, Cin) bf16  tap-major weights, tap t = (ky+1)*3 + (kx+1)
    b_ref:    (Cout, 1)      f32   bias
    mask_ref: (9, 1, Nblk)   f32   per-tap validity masks (1.0 inside image)
    o_ref:    (Cout, Nblk)   f32   output block
    """
    x = x_ref[...]                       # (Cin, Nblk) f32
    nblk = x.shape[-1]
    compute_dtype = w_ref.dtype          # bf16 (or f32 if use_bf16=False)

    acc = None
    t = 0
    for ky in (-1, 0, 1):
        for kx in (-1, 0, 1):
            off = ky * W + kx            # source offset on the flattened axis
            if off == 0:
                shifted = x
            else:
                # shifted[p] = x[(p + off) mod Nblk]; wrap-around and
                # cross-image bleed are zeroed by the precomputed mask.
                shifted = pltpu.roll(x, (-off) % nblk, 1)
            if not (ky == 0 and kx == 0):
                # Mask in f32 (v5e-safe), then cast just before the dot.
                shifted = shifted * mask_ref[t]          # (1, Nblk) broadcast
            part = jnp.dot(w_ref[t], shifted.astype(compute_dtype),
                           preferred_element_type=jnp.float32)
            acc = part if acc is None else acc + part
            t += 1

    o_ref[...] = (acc + b_ref[...]).astype(o_ref.dtype)


def _pick_batch_fold(batch, hw, target_lanes=512):
    """Smallest divisor Bt of batch such that Bt*hw >= target_lanes (else batch)."""
    for bt in range(1, batch + 1):
        if batch % bt == 0 and bt * hw >= target_lanes:
            return bt
    return batch


def conv_in_forward(x_nchw, weight_oihw, bias, *, use_bf16=True):
    """Forward pass of ConvIn (= nn.Conv2d(in_ch, out_ch, 3, padding=1)).

    x_nchw:      (B, Cin, H, W)    float32
    weight_oihw: (Cout, Cin, 3, 3) float32 (PyTorch layout)
    bias:        (Cout,)           float32
    returns:     (B, Cout, H, W)   float32
    """
    B, Cin, H, W = x_nchw.shape
    Cout = weight_oihw.shape[0]
    HW = H * W

    Bt = _pick_batch_fold(B, HW)
    nblk = Bt * HW
    n_groups = B // Bt
    # TODO(synk): for general H, W pick Bt (or pad W) so nblk % 128 == 0;
    # misaligned lane widths fall back to masked partial stores.

    compute_dtype = jnp.bfloat16 if use_bf16 else jnp.float32

    # (B, Cin, H, W) -> (Cin, B*H*W): channels on sublanes, batch folded onto
    # the lane axis.  One tiny wrapper transpose; transposed back at the end.
    x2 = jnp.transpose(x_nchw, (1, 0, 2, 3)).reshape(Cin, B * HW)

    # (Cout, Cin, 3, 3) -> tap-major (9, Cout, Cin); cast operands for the MXU.
    w_taps = jnp.transpose(weight_oihw, (2, 3, 0, 1)).reshape(9, Cout, Cin)
    w_taps = w_taps.astype(compute_dtype)
    b2 = bias.reshape(Cout, 1).astype(jnp.float32)

    # Grid-invariant per-tap boundary masks (also kill cross-image roll bleed).
    pos = jnp.arange(nblk, dtype=jnp.int32)
    q = pos % HW
    row = q // W
    col = q % W
    mask_rows = []
    for ky in (-1, 0, 1):
        for kx in (-1, 0, 1):
            valid = ((row + ky >= 0) & (row + ky < H)
                     & (col + kx >= 0) & (col + kx < W))
            mask_rows.append(valid.astype(jnp.float32))
    masks = jnp.stack(mask_rows, axis=0).reshape(9, 1, nblk)

    kernel = functools.partial(conv3x3_kernel, W=W)

    out2 = pl.pallas_call(
        kernel,
        out_shape=jax.ShapeDtypeStruct((Cout, B * HW), x_nchw.dtype),
        grid_spec=pltpu.PrefetchScalarGridSpec(
            num_scalar_prefetch=0,
            grid=(n_groups,),
            in_specs=[
                pl.BlockSpec((Cin, nblk), lambda g: (0, g)),
                pl.BlockSpec((9, Cout, Cin), lambda g: (0, 0, 0)),
                pl.BlockSpec((Cout, 1), lambda g: (0, 0)),
                pl.BlockSpec((9, 1, nblk), lambda g: (0, 0, 0)),
            ],
            out_specs=pl.BlockSpec((Cout, nblk), lambda g: (0, g)),
        ),
        compiler_params=pltpu.CompilerParams(
            dimension_semantics=("parallel",),
            vmem_limit_bytes=32 * 1024 * 1024,
        ),
    )(x2, w_taps, b2, masks)

    # (Cout, B*HW) -> (B, Cout, H, W)  (free reshape + tiny transpose back)
    return jnp.transpose(out2.reshape(Cout, B, H, W), (1, 0, 2, 3))


if __name__ == "__main__":
    key = jax.random.PRNGKey(0)
    k_x, k_w, k_b = jax.random.split(key, 3)

    B, Cin, Cout, H, W = 2, 4, 8, 16, 16

    x = jax.random.normal(k_x, (B, Cin, H, W), dtype=jnp.float32)
    # Deterministic "Kaiming-ish" init for Conv2d(Cin, Cout, 3, padding=1).
    fan_in = Cin * 3 * 3
    bound = 1.0 / (fan_in ** 0.5)
    weight = jax.random.uniform(
        k_w, (Cout, Cin, 3, 3), dtype=jnp.float32, minval=-bound, maxval=bound)
    bias = jax.random.uniform(
        k_b, (Cout,), dtype=jnp.float32, minval=-bound, maxval=bound)

    out = conv_in_forward(x, weight, bias)
    out = jax.block_until_ready(out)

    # Reference check against lax conv (NCHW, OIHW).
    ref = jax.lax.conv_general_dilated(
        x, weight, window_strides=(1, 1), padding=((1, 1), (1, 1)),
        dimension_numbers=("NCHW", "OIHW", "NCHW"),
    ) + bias.reshape(1, Cout, 1, 1)
    ref = jax.block_until_ready(ref)

    assert out.shape == (B, Cout, H, W)
    # bf16 MXU operands with f32 accumulation: deliberately looser tolerance
    # than the pure-f32 PyTorch module (accepted in the perf review).
    assert jnp.allclose(out, ref, atol=3e-2, rtol=3e-2), float(
        jnp.max(jnp.abs(out - ref)))
    print("KERNEL_OK")
</pallas_src>

<mosaic_0001>
module attributes {stable_mosaic.version = 11 : i64} {
  func.func @conv3x3_kernel(%arg0: i32, %arg1: memref<4x512xf32, #tpu.memory_space<vmem>>, %arg2: memref<9x8x4xbf16, #tpu.memory_space<vmem>>, %arg3: memref<8x1xf32, #tpu.memory_space<vmem>>, %arg4: memref<9x1x512xf32, #tpu.memory_space<vmem>>, %arg5: memref<8x512xf32, #tpu.memory_space<vmem>>) attributes {dimension_semantics = [#tpu.dimension_semantics<parallel>], iteration_bounds = array<i64: 1>, scalar_prefetch = 0 : i64, scratch_operands = 0 : i64, tpu.core_type = #tpu.core_type<tc>, window_params = [{transform_indices = @transform_0, window_bounds = array<i64: 4, 512>}, {pipeline_mode = #tpu.pipeline_mode<synchronous>, transform_indices = @transform_1, window_bounds = array<i64: 9, 8, 4>}, {pipeline_mode = #tpu.pipeline_mode<synchronous>, transform_indices = @transform_2, window_bounds = array<i64: 8, 1>}, {pipeline_mode = #tpu.pipeline_mode<synchronous>, transform_indices = @transform_3, window_bounds = array<i64: 9, 1, 512>}, {transform_indices = @transform_4, window_bounds = array<i64: 8, 512>}]} {
    %c0 = arith.constant 0 : index
    %c0_0 = arith.constant 0 : index
    %0 = vector.load %arg1[%c0, %c0_0] : memref<4x512xf32, #tpu.memory_space<vmem>>, vector<4x512xf32>
    %c17_i32 = arith.constant 17 : i32
    %1 = tpu.dynamic_rotate %0 by %c17_i32 dim 1 : vector<4x512xf32>, i32 -> vector<4x512xf32>
    %c0_1 = arith.constant 0 : index
    %c0_2 = arith.constant 0 : index
    %c0_3 = arith.constant 0 : index
    %2 = vector.load %arg4[%c0_1, %c0_2, %c0_3] : memref<9x1x512xf32, #tpu.memory_space<vmem>>, vector<1x1x512xf32>
    %3 = vector.shape_cast %2 : vector<1x1x512xf32> to vector<1x512xf32>
    %4 = vector.broadcast %3 : vector<1x512xf32> to vector<4x512xf32>
    %5 = arith.mulf %1, %4 : vector<4x512xf32>
    %c0_4 = arith.constant 0 : index
    %c0_5 = arith.constant 0 : index
    %c0_6 = arith.constant 0 : index
    %6 = vector.load %arg2[%c0_4, %c0_5, %c0_6] : memref<9x8x4xbf16, #tpu.memory_space<vmem>>, vector<1x8x4xbf16>
    %7 = vector.shape_cast %6 : vector<1x8x4xbf16> to vector<8x4xbf16>
    %8 = arith.truncf %5 : vector<4x512xf32> to vector<4x512xbf16>
    %cst = arith.constant dense<0.000000e+00> : vector<8x512xf32>
    %9 = tpu.matmul %7, %8, %cst {dimension_numbers = #tpu.dot_dimension_numbers<[1], [0], [0], [1], [0, 0, 1, 1], [], []>} : vector<8x4xbf16>, vector<4x512xbf16>, vector<8x512xf32> -> vector<8x512xf32>
    %c16_i32 = arith.constant 16 : i32
    %10 = tpu.dynamic_rotate %0 by %c16_i32 dim 1 : vector<4x512xf32>, i32 -> vector<4x512xf32>
    %c1 = arith.constant 1 : index
    %c0_7 = arith.constant 0 : index
    %c0_8 = arith.constant 0 : index
    %11 = vector.load %arg4[%c1, %c0_7, %c0_8] : memref<9x1x512xf32, #tpu.memory_space<vmem>>, vector<1x1x512xf32>
    %12 = vector.shape_cast %11 : vector<1x1x512xf32> to vector<1x512xf32>
    %13 = vector.broadcast %12 : vector<1x512xf32> to vector<4x512xf32>
    %14 = arith.mulf %10, %13 : vector<4x512xf32>
    %c1_9 = arith.constant 1 : index
    %c0_10 = arith.constant 0 : index
    %c0_11 = arith.constant 0 : index
    %15 = vector.load %arg2[%c1_9, %c0_10, %c0_11] : memref<9x8x4xbf16, #tpu.memory_space<vmem>>, vector<1x8x4xbf16>
    %16 = vector.shape_cast %15 : vector<1x8x4xbf16> to vector<8x4xbf16>
    %17 = arith.truncf %14 : vector<4x512xf32> to vector<4x512xbf16>
    %cst_12 = arith.constant dense<0.000000e+00> : vector<8x512xf32>
    %18 = tpu.matmul %16, %17, %cst_12 {dimension_numbers = #tpu.dot_dimension_numbers<[1], [0], [0], [1], [0, 0, 1, 1], [], []>} : vector<8x4xbf16>, vector<4x512xbf16>, vector<8x512xf32> -> vector<8x512xf32>
    %19 = arith.addf %9, %18 : vector<8x512xf32>
    %c15_i32 = arith.constant 15 : i32
    %20 = tpu.dynamic_rotate %0 by %c15_i32 dim 1 : vector<4x512xf32>, i32 -> vector<4x512xf32>
    %c2 = arith.constant 2 : index
    %c0_13 = arith.constant 0 : index
    %c0_14 = arith.constant 0 : index
    %21 = vector.load %arg4[%c2, %c0_13, %c0_14] : memref<9x1x512xf32, #tpu.memory_space<vmem>>, vector<1x1x512xf32>
    %22 = vector.shape_cast %21 : vector<1x1x512xf32> to vector<1x512xf32>
    %23 = vector.broadcast %22 : vector<1x512xf32> to vector<4x512xf32>
    %24 = arith.mulf %20, %23 : vector<4x512xf32>
    %c2_15 = arith.constant 2 : index
    %c0_16 = arith.constant 0 : index
    %c0_17 = arith.constant 0 : index
    %25 = vector.load %arg2[%c2_15, %c0_16, %c0_17] : memref<9x8x4xbf16, #tpu.memory_space<vmem>>, vector<1x8x4xbf16>
    %26 = vector.shape_cast %25 : vector<1x8x4xbf16> to vector<8x4xbf16>
    %27 = arith.truncf %24 : vector<4x512xf32> to vector<4x512xbf16>
    %cst_18 = arith.constant dense<0.000000e+00> : vector<8x512xf32>
    %28 = tpu.matmul %26, %27, %cst_18 {dimension_numbers = #tpu.dot_dimension_numbers<[1], [0], [0], [1], [0, 0, 1, 1], [], []>} : vector<8x4xbf16>, vector<4x512xbf16>, vector<8x512xf32> -> vector<8x512xf32>
    %29 = arith.addf %19, %28 : vector<8x512xf32>
    %c1_i32 = arith.constant 1 : i32
    %30 = tpu.dynamic_rotate %0 by %c1_i32 dim 1 : vector<4x512xf32>, i32 -> vector<4x512xf32>
    %c3 = arith.constant 3 : index
    %c0_19 = arith.constant 0 : index
    %c0_20 = arith.constant 0 : index
    %31 = vector.load %arg4[%c3, %c0_19, %c0_20] : memref<9x1x512xf32, #tpu.memory_space<vmem>>, vector<1x1x512xf32>
    %32 = vector.shape_cast %31 : vector<1x1x512xf32> to vector<1x512xf32>
    %33 = vector.broadcast %32 : vector<1x512xf32> to vector<4x512xf32>
    %34 = arith.mulf %30, %33 : vector<4x512xf32>
    %c3_21 = arith.constant 3 : index
    %c0_22 = arith.constant 0 : index
    %c0_23 = arith.constant 0 : index
    %35 = vector.load %arg2[%c3_21, %c0_22, %c0_23] : memref<9x8x4xbf16, #tpu.memory_space<vmem>>, vector<1x8x4xbf16>
    %36 = vector.shape_cast %35 : vector<1x8x4xbf16> to vector<8x4xbf16>
    %37 = arith.truncf %34 : vector<4x512xf32> to vector<4x512xbf16>
    %cst_24 = arith.constant dense<0.000000e+00> : vector<8x512xf32>
    %38 = tpu.matmul %36, %37, %cst_24 {dimension_numbers = #tpu.dot_dimension_numbers<[1], [0], [0], [1], [0, 0, 1, 1], [], []>} : vector<8x4xbf16>, vector<4x512xbf16>, vector<8x512xf32> -> vector<8x512xf32>
    %39 = arith.addf %29, %38 : vector<8x512xf32>
    %c4 = arith.constant 4 : index
    %c0_25 = arith.constant 0 : index
    %c0_26 = arith.constant 0 : index
    %40 = vector.load %arg2[%c4, %c0_25, %c0_26] : memref<9x8x4xbf16, #tpu.memory_space<vmem>>, vector<1x8x4xbf16>
    %41 = vector.shape_cast %40 : vector<1x8x4xbf16> to vector<8x4xbf16>
    %42 = arith.truncf %0 : vector<4x512xf32> to vector<4x512xbf16>
    %cst_27 = arith.constant dense<0.000000e+00> : vector<8x512xf32>
    %43 = tpu.matmul %41, %42, %cst_27 {dimension_numbers = #tpu.dot_dimension_numbers<[1], [0], [0], [1], [0, 0, 1, 1], [], []>} : vector<8x4xbf16>, vector<4x512xbf16>, vector<8x512xf32> -> vector<8x512xf32>
    %44 = arith.addf %39, %43 : vector<8x512xf32>
    %c511_i32 = arith.constant 511 : i32
    %45 = tpu.dynamic_rotate %0 by %c511_i32 dim 1 : vector<4x512xf32>, i32 -> vector<4x512xf32>
    %c5 = arith.constant 5 : index
    %c0_28 = arith.constant 0 : index
    %c0_29 = arith.constant 0 : index
    %46 = vector.load %arg4[%c5, %c0_28, %c0_29] : memref<9x1x512xf32, #tpu.memory_space<vmem>>, vector<1x1x512xf32>
    %47 = vector.shape_cast %46 : vector<1x1x512xf32> to vector<1x512xf32>
    %48 = vector.broadcast %47 : vector<1x512xf32> to vector<4x512xf32>
    %49 = arith.mulf %45, %48 : vector<4x512xf32>
    %c5_30 = arith.constant 5 : index
    %c0_31 = arith.constant 0 : index
    %c0_32 = arith.constant 0 : index
    %50 = vector.load %arg2[%c5_30, %c0_31, %c0_32] : memref<9x8x4xbf16, #tpu.memory_space<vmem>>, vector<1x8x4xbf16>
    %51 = vector.shape_cast %50 : vector<1x8x4xbf16> to vector<8x4xbf16>
    %52 = arith.truncf %49 : vector<4x512xf32> to vector<4x512xbf16>
    %cst_33 = arith.constant dense<0.000000e+00> : vector<8x512xf32>
    %53 = tpu.matmul %51, %52, %cst_33 {dimension_numbers = #tpu.dot_dimension_numbers<[1], [0], [0], [1], [0, 0, 1, 1], [], []>} : vector<8x4xbf16>, vector<4x512xbf16>, vector<8x512xf32> -> vector<8x512xf32>
    %54 = arith.addf %44, %53 : vector<8x512xf32>
    %c497_i32 = arith.constant 497 : i32
    %55 = tpu.dynamic_rotate %0 by %c497_i32 dim 1 : vector<4x512xf32>, i32 -> vector<4x512xf32>
    %c6 = arith.constant 6 : index
    %c0_34 = arith.constant 0 : index
    %c0_35 = arith.constant 0 : index
    %56 = vector.load %arg4[%c6, %c0_34, %c0_35] : memref<9x1x512xf32, #tpu.memory_space<vmem>>, vector<1x1x512xf32>
    %57 = vector.shape_cast %56 : vector<1x1x512xf32> to vector<1x512xf32>
    %58 = vector.broadcast %57 : vector<1x512xf32> to vector<4x512xf32>
    %59 = arith.mulf %55, %58 : vector<4x512xf32>
    %c6_36 = arith.constant 6 : index
    %c0_37 = arith.constant 0 : index
    %c0_38 = arith.constant 0 : index
    %60 = vector.load %arg2[%c6_36, %c0_37, %c0_38] : memref<9x8x4xbf16, #tpu.memory_space<vmem>>, vector<1x8x4xbf16>
    %61 = vector.shape_cast %60 : vector<1x8x4xbf16> to vector<8x4xbf16>
    %62 = arith.truncf %59 : vector<4x512xf32> to vector<4x512xbf16>
    %cst_39 = arith.constant dense<0.000000e+00> : vector<8x512xf32>
    %63 = tpu.matmul %61, %62, %cst_39 {dimension_numbers = #tpu.dot_dimension_numbers<[1], [0], [0], [1], [0, 0, 1, 1], [], []>} : vector<8x4xbf16>, vector<4x512xbf16>, vector<8x512xf32> -> vector<8x512xf32>
    %64 = arith.addf %54, %63 : vector<8x512xf32>
    %c496_i32 = arith.constant 496 : i32
    %65 = tpu.dynamic_rotate %0 by %c496_i32 dim 1 : vector<4x512xf32>, i32 -> vector<4x512xf32>
    %c7 = arith.constant 7 : index
    %c0_40 = arith.constant 0 : index
    %c0_41 = arith.constant 0 : index
    %66 = vector.load %arg4[%c7, %c0_40, %c0_41] : memref<9x1x512xf32, #tpu.memory_space<vmem>>, vector<1x1x512xf32>
    %67 = vector.shape_cast %66 : vector<1x1x512xf32> to vector<1x512xf32>
    %68 = vector.broadcast %67 : vector<1x512xf32> to vector<4x512xf32>
    %69 = arith.mulf %65, %68 : vector<4x512xf32>
    %c7_42 = arith.constant 7 : index
    %c0_43 = arith.constant 0 : index
    %c0_44 = arith.constant 0 : index
    %70 = vector.load %arg2[%c7_42, %c0_43, %c0_44] : memref<9x8x4xbf16, #tpu.memory_space<vmem>>, vector<1x8x4xbf16>
    %71 = vector.shape_cast %70 : vector<1x8x4xbf16> to vector<8x4xbf16>
    %72 = arith.truncf %69 : vector<4x512xf32> to vector<4x512xbf16>
    %cst_45 = arith.constant dense<0.000000e+00> : vector<8x512xf32>
    %73 = tpu.matmul %71, %72, %cst_45 {dimension_numbers = #tpu.dot_dimension_numbers<[1], [0], [0], [1], [0, 0, 1, 1], [], []>} : vector<8x4xbf16>, vector<4x512xbf16>, vector<8x512xf32> -> vector<8x512xf32>
    %74 = arith.addf %64, %73 : vector<8x512xf32>
    %c495_i32 = arith.constant 495 : i32
    %75 = tpu.dynamic_rotate %0 by %c495_i32 dim 1 : vector<4x512xf32>, i32 -> vector<4x512xf32>
    %c8 = arith.constant 8 : index
    %c0_46 = arith.constant 0 : index
    %c0_47 = arith.constant 0 : index
    %76 = vector.load %arg4[%c8, %c0_46, %c0_47] : memref<9x1x512xf32, #tpu.memory_space<vmem>>, vector<1x1x512xf32>
    %77 = vector.shape_cast %76 : vector<1x1x512xf32> to vector<1x512xf32>
    %78 = vector.broadcast %77 : vector<1x512xf32> to vector<4x512xf32>
    %79 = arith.mulf %75, %78 : vector<4x512xf32>
    %c8_48 = arith.constant 8 : index
    %c0_49 = arith.constant 0 : index
    %c0_50 = arith.constant 0 : index
    %80 = vector.load %arg2[%c8_48, %c0_49, %c0_50] : memref<9x8x4xbf16, #tpu.memory_space<vmem>>, vector<1x8x4xbf16>
    %81 = vector.shape_cast %80 : vector<1x8x4xbf16> to vector<8x4xbf16>
    %82 = arith.truncf %79 : vector<4x512xf32> to vector<4x512xbf16>
    %cst_51 = arith.constant dense<0.000000e+00> : vector<8x512xf32>
    %83 = tpu.matmul %81, %82, %cst_51 {dimension_numbers = #tpu.dot_dimension_numbers<[1], [0], [0], [1], [0, 0, 1, 1], [], []>} : vector<8x4xbf16>, vector<4x512xbf16>, vector<8x512xf32> -> vector<8x512xf32>
    %84 = arith.addf %74, %83 : vector<8x512xf32>
    %c0_52 = arith.constant 0 : index
    %c0_53 = arith.constant 0 : index
    %85 = vector.load %arg3[%c0_52, %c0_53] : memref<8x1xf32, #tpu.memory_space<vmem>>, vector<8x1xf32>
    %86 = vector.broadcast %85 : vector<8x1xf32> to vector<8x512xf32>
    %87 = arith.addf %84, %86 : vector<8x512xf32>
    %c0_54 = arith.constant 0 : index
    %c0_55 = arith.constant 0 : index
    %88 = vector.load %arg5[%c0_54, %c0_55] : memref<8x512xf32, #tpu.memory_space<vmem>>, vector<8x512xf32>
    tpu.vector_store %arg5[%c0_54, %c0_55], %87 {strides = array<i32>} : memref<8x512xf32, #tpu.memory_space<vmem>>, vector<8x512xf32>,
    return
  }
  func.func @transform_0(%arg0: i32) -> (i32, i32) {
    %c0_i32 = arith.constant 0 : i32
    %c0_i32_0 = arith.constant 0 : i32
    return %c0_i32, %arg0 : i32, i32
  }
  func.func @transform_1(%arg0: i32) -> (i32, i32, i32) {
    %c0_i32 = arith.constant 0 : i32
    %c0_i32_0 = arith.constant 0 : i32
    %c0_i32_1 = arith.constant 0 : i32
    %c0_i32_2 = arith.constant 0 : i32
    return %c0_i32, %c0_i32_0, %c0_i32_1 : i32, i32, i32
  }
  func.func @transform_2(%arg0: i32) -> (i32, i32) {
    %c0_i32 = arith.constant 0 : i32
    %c0_i32_0 = arith.constant 0 : i32
    %c0_i32_1 = arith.constant 0 : i32
    return %c0_i32, %c0_i32_0 : i32, i32
  }
  func.func @transform_3(%arg0: i32) -> (i32, i32, i32) {
    %c0_i32 = arith.constant 0 : i32
    %c0_i32_0 = arith.constant 0 : i32
    %c0_i32_1 = arith.constant 0 : i32
    %c0_i32_2 = arith.constant 0 : i32
    return %c0_i32, %c0_i32_0, %c0_i32_1 : i32, i32, i32
  }
  func.func @transform_4(%arg0: i32) -> (i32, i32) {
    %c0_i32 = arith.constant 0 : i32
    %c0_i32_0 = arith.constant 0 : i32
    return %c0_i32, %arg0 : i32, i32
  }
}

</mosaic_0001>

<llo_original>
// kernel: tpu_custom_call.1
$region0: #{tpu_custom_call.1}
  #allocation0 [shape = 'u32[]', space=smem, size = 0x4, offset = 0x4, fixed_abs, tag = 'smem constant byte address 0x4 - core index']
  #allocation1 [shape = 'u32[144,128]{1,0:T(1,128)}', space=vmem, size = 0x12000, scoped, tag = 'internal scratch']
  %s0 = inlined_call_operand.vmem [shape: f32[4,512], index: 0, kind: input, shape index: {}]
  %s1 = inlined_call_operand.vmem [shape: bf16[9,8,4], index: 1, kind: input, shape index: {}]
  %s2 = inlined_call_operand.vmem [shape: f32[8,1], index: 2, kind: input, shape index: {}]
  %s3 = inlined_call_operand.vmem [shape: f32[9,1,512], index: 3, kind: input, shape index: {}]
  %s4 = inlined_call_operand.hbm [shape: f32[8,512], index: 4, kind: output, shape index: {}]
  %s5 = sld [smem:[#allocation0]]
  $region26: #{tpu_custom_call.1} parent=0
    _
  %s7 = ssub.s32 1, %s5
  %s8 = scalar_select 0, %s7, %s5
  $region1: #{tpu_custom_call.1} parent=0
    #allocation2 [shape = 'u8[16384]{0}', space=vmem, size = 0x4000, scoped, tag = 'output window, operand 0, single buffered']
    #allocation3 [shape = 's32[1]{0}', space=sflag, size = 0x4, scoped, tag = 'scoped memory for tpu_custom_call.1']
    %9 = vsyncpa [#allocation3], 0
    // Predicated region
    $region2: #{tpu_custom_call.1} parent=1 // pred_check
      _
    $region3: #{tpu_custom_call.1} parent=1 // pred_check_branch
      %11 = sbr.rel (0) target = $region5
    $region4: #{tpu_custom_call.1} parent=1 // pred_region
      _
    $region5: #{tpu_custom_call.1} parent=1 // pred_fallthru
      _
    // Predicated region
    $region6: #{tpu_custom_call.1} parent=1 // pred_check
      _
    $region7: #{tpu_custom_call.1} parent=1 // pred_check_branch
      %13 = sbr.rel (0) target = $region9
    $region8: #{tpu_custom_call.1} parent=1 // pred_region
      _
    $region9: #{tpu_custom_call.1} parent=1 // pred_fallthru
      _
    // Predicated region
    $region10: #{tpu_custom_call.1} parent=1 // pred_check
      _
    $region11: #{tpu_custom_call.1} parent=1 // pred_check_branch
      %15 = sbr.rel (0) target = $region13
    $region12: #{tpu_custom_call.1} parent=1 // pred_region
      _
    $region13: #{tpu_custom_call.1} parent=1 // pred_fallthru
      _
    // Predicated region
    $region14: #{tpu_custom_call.1} parent=1 // pred_check
      _
    $region15: #{tpu_custom_call.1} parent=1 // pred_check_branch
      %17 = sbr.rel (0) target = $region17
    $region16: #{tpu_custom_call.1} parent=1 // pred_region
      _
    $region17: #{tpu_custom_call.1} parent=1 // pred_fallthru
      _
    %v19 = vld [vmem:[%s0] sm:$0xff]
    %v20 = vld [vmem:[%s0 + $0x8] sm:$0xff]
    %v23 = vcombine.high %v19, %v19
    %v24 = vcombine.high %v20, %v20
    %27 = vrot.lane.b32.xlu0 %v19, 17
    %v28 = vpop.permute.xlu0 %27
    %29 = vrot.lane.b32.xlu0 %v23, 17
    %v30 = vpop.permute.xlu0 %29
    %31 = vrot.lane.b32.xlu0 %v20, 17
    %v32 = vpop.permute.xlu0 %31
    %33 = vrot.lane.b32.xlu0 %v24, 17
    %v34 = vpop.permute.xlu0 %33
    %v35 = vlaneseq
    %v36 = vand.u32 %v35, 127
    %vm37 = vcmp.lt.s32.totalorder %v36, 17
    %v38 = vsel %vm37, %v32, %v34
    %v39 = vsel %vm37, %v30, %v32
    %v40 = vsel %vm37, %v28, %v30
    %v41 = vsel %vm37, %v34, %v28
    %v42 = vld [vmem:[%s3] sm:$0xf]
    %v44 = vlaneseq
    %v45 = vshrl.u32 %v44, 7
    %v46 = vsub.s32 0, %v45
    %v47 = vrot.slane %v42, %v46
    %v48 = vlaneseq
    %v49 = vshrl.u32 %v48, 7
    %v50 = vsub.s32 1, %v49
    %v51 = vrot.slane %v42, %v50
    %v52 = vlaneseq
    %v53 = vshrl.u32 %v52, 7
    %v54 = vsub.s32 2, %v53
    %v55 = vrot.slane %v42, %v54
    %v56 = vlaneseq
    %v57 = vshrl.u32 %v56, 7
    %v58 = vsub.s32 3, %v57
    %v59 = vrot.slane %v42, %v58
    %v64 = vmul.f32 %v41, %v47
    %v65 = vmul.f32 %v40, %v51
    %v66 = vmul.f32 %v39, %v55
    %v67 = vmul.f32 %v38, %v59
    %v68 = vld [vmem:[%s1] sm:$0xf]
    %v69 = vpack.c.bf16 %v64, %v64
    %v70 = vpack.c.bf16 %v65, %v65
    %v71 = vpack.c.bf16 %v66, %v66
    %v72 = vpack.c.bf16 %v67, %v67
    %73 = vrot.lane.b32.xlu0 %v19, 16
    %v74 = vpop.permute.xlu0 %73
    %75 = vrot.lane.b32.xlu0 %v23, 16
    %v76 = vpop.permute.xlu0 %75
    %77 = vrot.lane.b32.xlu0 %v20, 16
    %v78 = vpop.permute.xlu0 %77
    %79 = vrot.lane.b32.xlu0 %v24, 16
    %v80 = vpop.permute.xlu0 %79
    %vm81 = vcmp.lt.s32.totalorder %v36, 16
    %v82 = vsel %vm81, %v78, %v80
    %v83 = vsel %vm81, %v76, %v78
    %v84 = vsel %vm81, %v74, %v76
    %v85 = vsel %vm81, %v80, %v74
    %s86 = scalar_lea.vmem %s3, 4
    %v87 = vld [vmem:[%s86] sm:$0xf]
    %v89 = vlaneseq
    %v90 = vshrl.u32 %v89, 7
    %v91 = vsub.s32 0, %v90
    %v92 = vrot.slane %v87, %v91
    %v93 = vlaneseq
    %v94 = vshrl.u32 %v93, 7
    %v95 = vsub.s32 1, %v94
    %v96 = vrot.slane %v87, %v95
    %v97 = vlaneseq
    %v98 = vshrl.u32 %v97, 7
    %v99 = vsub.s32 2, %v98
    %v100 = vrot.slane %v87, %v99
    %v101 = vlaneseq
    %v102 = vshrl.u32 %v101, 7
    %v103 = vsub.s32 3, %v102
    %v104 = vrot.slane %v87, %v103
    %v109 = vmul.f32 %v85, %v92
    %v110 = vmul.f32 %v84, %v96
    %v111 = vmul.f32 %v83, %v100
    %v112 = vmul.f32 %v82, %v104
    %s113 = scalar_lea.vmem %s1, 4
    %v114 = vld [vmem:[%s113] sm:$0xf]
    %v115 = vpack.c.bf16 %v109, %v109
    %v116 = vpack.c.bf16 %v110, %v110
    %v117 = vpack.c.bf16 %v111, %v111
    %v118 = vpack.c.bf16 %v112, %v112
    %vm119 = vcmask 31744
    %v121 = vsel %vm119, %v114, 0
    %vm123 = vcmask 1041408
    %v125 = vsel %vm123, %v115, 0
    %v128 = vsel %vm123, %v116, 0
    %v131 = vsel %vm123, %v117, 0
    %v134 = vsel %vm123, %v118, 0
    %136 = vmatprep.subr.bf16.mxu0 %v128
    %137 = vmatpush1.bf16.msra.mxu0 %v125
    %138 = vmatprep.subr.bf16.mxu0 0
    %139 = vmatpush1.bf16.msra.mxu0 0
    %140 = vmatprep.subr.bf16.mxu0 0
    %141 = vmatpush1.bf16.msra.mxu0 0
    %142 = vmatprep.subr.bf16.mxu0 0
    %143 = vmatpush1.bf16.msra.mxu0 0
    %144 = vmatprep.subr.bf16.mxu0 0
    %145 = vmatpush1.bf16.msra.mxu0 0
    %146 = vmatprep.subr.bf16.mxu0 0
    %147 = vmatpush1.bf16.msra.mxu0 0
    %148 = vmatprep.subr.bf16.mxu0 0
    %149 = vmatpush1.bf16.msra.mxu0 0
    %150 = vmatprep.subr.bf16.mxu0 0
    %151 = vmatpush1.bf16.msra.mxu0 0
    %152 = vmatprep.subr.bf16.mxu0 0
    %153 = vmatpush1.bf16.msra.mxu0 0
    %154 = vmatprep.subr.bf16.mxu0 0
    %155 = vmatpush1.bf16.msra.mxu0 0
    %156 = vmatprep.subr.bf16.mxu0 0
    %157 = vmatpush1.bf16.msra.mxu0 0
    %158 = vmatprep.subr.bf16.mxu0 0
    %159 = vmatpush1.bf16.msra.mxu0 0
    %160 = vmatprep.subr.bf16.mxu0 0
    %161 = vmatpush1.bf16.msra.mxu0 0
    %162 = vmatprep.subr.bf16.mxu0 0
    %163 = vmatpush1.bf16.msra.mxu0 0
    %164 = vmatprep.subr.bf16.mxu0 0
    %165 = vmatpush1.bf16.msra.mxu0 0
    %166 = vmatprep.subr.bf16.mxu0 0
    %167 = vmatpush1.bf16.msra.mxu0 0
    %168 = vmatprep.mubr.bf16.mxu0 0
    %169 = vmatmul.mubr.bf16.gmra.mrb[0].mxu0 %v121
    %v170 = vpop.f32.mrb[0].mxu0
    %v171 = vadd.f32 0.0, %v170
    %v172 = vpop.f32.mrb[0].mxu0
    %v173 = vadd.f32 0.0, %v172
    %v174 = vpop.f32.mrb[0].mxu0
    %v175 = vpop.f32.mrb[0].mxu0
    %176 = vdwg.mxu0
    %177 = vmatprep.subr.bf16.mxu0 %v134
    %178 = vmatpush1.bf16.msra.mxu0 %v131
    %179 = vmatprep.subr.bf16.mxu0 0
    %180 = vmatpush1.bf16.msra.mxu0 0
    %181 = vmatprep.subr.bf16.mxu0 0
    %182 = vmatpush1.bf16.msra.mxu0 0
    %183 = vmatprep.subr.bf16.mxu0 0
    %184 = vmatpush1.bf16.msra.mxu0 0
    %185 = vmatprep.subr.bf16.mxu0 0
    %186 = vmatpush1.bf16.msra.mxu0 0
    %187 = vmatprep.subr.bf16.mxu0 0
    %188 = vmatpush1.bf16.msra.mxu0 0
    %189 = vmatprep.subr.bf16.mxu0 0
    %190 = vmatpush1.bf16.msra.mxu0 0
    %191 = vmatprep.subr.bf16.mxu0 0
    %192 = vmatpush1.bf16.msra.mxu0 0
    %193 = vmatprep.subr.bf16.mxu0 0
    %194 = vmatpush1.bf16.msra.mxu0 0
    %195 = vmatprep.subr.bf16.mxu0 0
    %196 = vmatpush1.bf16.msra.mxu0 0
    %197 = vmatprep.subr.bf16.mxu0 0
    %198 = vmatpush1.bf16.msra.mxu0 0
    %199 = vmatprep.subr.bf16.mxu0 0
    %200 = vmatpush1.bf16.msra.mxu0 0
    %201 = vmatprep.subr.bf16.mxu0 0
    %202 = vmatpush1.bf16.msra.mxu0 0
    %203 = vmatprep.subr.bf16.mxu0 0
    %204 = vmatpush1.bf16.msra.mxu0 0
    %205 = vmatprep.subr.bf16.mxu0 0
    %206 = vmatpush1.bf16.msra.mxu0 0
    %207 = vmatprep.subr.bf16.mxu0 0
    %208 = vmatpush1.bf16.msra.mxu0 0
    %209 = vmatprep.mubr.bf16.mxu0 0
    %210 = vmatmul.mubr.bf16.gmra.mrb[0].mxu0 %v121
    %v211 = vpop.f32.mrb[0].mxu0
    %v212 = vadd.f32 0.0, %v211
    %v213 = vpop.f32.mrb[0].mxu0
    %v214 = vadd.f32 0.0, %v213
    %v215 = vpop.f32.mrb[0].mxu0
    %v216 = vpop.f32.mrb[0].mxu0
    %217 = vdwg.mxu0
    %v219 = vsel %vm119, %v68, 0
    %v222 = vsel %vm123, %v69, 0
    %v225 = vsel %vm123, %v70, 0
    %v228 = vsel %vm123, %v71, 0
    %v231 = vsel %vm123, %v72, 0
    %233 = vmatprep.subr.bf16.mxu0 %v225
    %234 = vmatpush1.bf16.msra.mxu0 %v222
    %235 = vmatprep.subr.bf16.mxu0 0
    %236 = vmatpush1.bf16.msra.mxu0 0
    %237 = vmatprep.subr.bf16.mxu0 0
    %238 = vmatpush1.bf16.msra.mxu0 0
    %239 = vmatprep.subr.bf16.mxu0 0
    %240 = vmatpush1.bf16.msra.mxu0 0
    %241 = vmatprep.subr.bf16.mxu0 0
    %242 = vmatpush1.bf16.msra.mxu0 0
    %243 = vmatprep.subr.bf16.mxu0 0
    %244 = vmatpush1.bf16.msra.mxu0 0
    %245 = vmatprep.subr.bf16.mxu0 0
    %246 = vmatpush1.bf16.msra.mxu0 0
    %247 = vmatprep.subr.bf16.mxu0 0
    %248 = vmatpush1.bf16.msra.mxu0 0
    %249 = vmatprep.subr.bf16.mxu0 0
    %250 = vmatpush1.bf16.msra.mxu0 0
    %251 = vmatprep.subr.bf16.mxu0 0
    %252 = vmatpush1.bf16.msra.mxu0 0
    %253 = vmatprep.subr.bf16.mxu0 0
    %254 = vmatpush1.bf16.msra.mxu0 0
    %255 = vmatprep.subr.bf16.mxu0 0
    %256 = vmatpush1.bf16.msra.mxu0 0
    %257 = vmatprep.subr.bf16.mxu0 0
    %258 = vmatpush1.bf16.msra.mxu0 0
    %259 = vmatprep.subr.bf16.mxu0 0
    %260 = vmatpush1.bf16.msra.mxu0 0
    %261 = vmatprep.subr.bf16.mxu0 0
    %262 = vmatpush1.bf16.msra.mxu0 0
    %263 = vmatprep.subr.bf16.mxu0 0
    %264 = vmatpush1.bf16.msra.mxu0 0
    %265 = vmatprep.mubr.bf16.mxu0 0
    %266 = vmatmul.mubr.bf16.gmra.mrb[0].mxu0 %v219
    %v267 = vpop.f32.mrb[0].mxu0
    %v268 = vadd.f32 %v171, %v267
    %v269 = vpop.f32.mrb[0].mxu0
    %v270 = vadd.f32 %v173, %v269
    %v271 = vpop.f32.mrb[0].mxu0
    %v272 = vpop.f32.mrb[0].mxu0
    %273 = vdwg.mxu0
    %274 = vmatprep.subr.bf16.mxu0 %v231
    %275 = vmatpush1.bf16.msra.mxu0 %v228
    %276 = vmatprep.subr.bf16.mxu0 0
    %277 = vmatpush1.bf16.msra.mxu0 0
    %278 = vmatprep.subr.bf16.mxu0 0
    %279 = vmatpush1.bf16.msra.mxu0 0
    %280 = vmatprep.subr.bf16.mxu0 0
    %281 = vmatpush1.bf16.msra.mxu0 0
    %282 = vmatprep.subr.bf16.mxu0 0
    %283 = vmatpush1.bf16.msra.mxu0 0
    %284 = vmatprep.subr.bf16.mxu0 0
    %285 = vmatpush1.bf16.msra.mxu0 0
    %286 = vmatprep.subr.bf16.mxu0 0
    %287 = vmatpush1.bf16.msra.mxu0 0
    %288 = vmatprep.subr.bf16.mxu0 0
    %289 = vmatpush1.bf16.msra.mxu0 0
    %290 = vmatprep.subr.bf16.mxu0 0
    %291 = vmatpush1.bf16.msra.mxu0 0
    %292 = vmatprep.subr.bf16.mxu0 0
    %293 = vmatpush1.bf16.msra.mxu0 0
    %294 = vmatprep.subr.bf16.mxu0 0
    %295 = vmatpush1.bf16.msra.mxu0 0
    %296 = vmatprep.subr.bf16.mxu0 0
    %297 = vmatpush1.bf16.msra.mxu0 0
    %298 = vmatprep.subr.bf16.mxu0 0
    %299 = vmatpush1.bf16.msra.mxu0 0
    %300 = vmatprep.subr.bf16.mxu0 0
    %301 = vmatpush1.bf16.msra.mxu0 0
    %302 = vmatprep.subr.bf16.mxu0 0
    %303 = vmatpush1.bf16.msra.mxu0 0
    %304 = vmatprep.subr.bf16.mxu0 0
    %305 = vmatpush1.bf16.msra.mxu0 0
    %306 = vmatprep.mubr.bf16.mxu0 0
    %307 = vmatmul.mubr.bf16.gmra.mrb[0].mxu0 %v219
    %v308 = vpop.f32.mrb[0].mxu0
    %v309 = vadd.f32 %v212, %v308
    %v310 = vpop.f32.mrb[0].mxu0
    %v311 = vadd.f32 %v214, %v310
    %v312 = vpop.f32.mrb[0].mxu0
    %v313 = vpop.f32.mrb[0].mxu0
    %314 = vdwg.mxu0
    %315 = vrot.lane.b32.xlu0 %v19, 15
    %v316 = vpop.permute.xlu0 %315
    %317 = vrot.lane.b32.xlu0 %v23, 15
    %v318 = vpop.permute.xlu0 %317
    %319 = vrot.lane.b32.xlu0 %v20, 15
    %v320 = vpop.permute.xlu0 %319
    %321 = vrot.lane.b32.xlu0 %v24, 15
    %v322 = vpop.permute.xlu0 %321
    %vm323 = vcmp.lt.s32.totalorder %v36, 15
    %v324 = vsel %vm323, %v320, %v322
    %v325 = vsel %vm323, %v318, %v320
    %v326 = vsel %vm323, %v316, %v318
    %v327 = vsel %vm323, %v322, %v316
    %s328 = scalar_lea.vmem %s3, 8
    %v329 = vld [vmem:[%s328] sm:$0xf]
    %v331 = vlaneseq
    %v332 = vshrl.u32 %v331, 7
    %v333 = vsub.s32 0, %v332
    %v334 = vrot.slane %v329, %v333
    %v335 = vlaneseq
    %v336 = vshrl.u32 %v335, 7
    %v337 = vsub.s32 1, %v336
    %v338 = vrot.slane %v329, %v337
    %v339 = vlaneseq
    %v340 = vshrl.u32 %v339, 7
    %v341 = vsub.s32 2, %v340
    %v342 = vrot.slane %v329, %v341
    %v343 = vlaneseq
    %v344 = vshrl.u32 %v343, 7
    %v345 = vsub.s32 3, %v344
    %v346 = vrot.slane %v329, %v345
    %v351 = vmul.f32 %v327, %v334
    %v352 = vmul.f32 %v326, %v338
    %v353 = vmul.f32 %v325, %v342
    %v354 = vmul.f32 %v324, %v346
    %s355 = scalar_lea.vmem %s1, 8
    %v356 = vld [vmem:[%s355] sm:$0xf]
    %v357 = vpack.c.bf16 %v351, %v351
    %v358 = vpack.c.bf16 %v352, %v352
    %v359 = vpack.c.bf16 %v353, %v353
    %v360 = vpack.c.bf16 %v354, %v354
    %v362 = vsel %vm119, %v356, 0
    %v365 = vsel %vm123, %v357, 0
    %v368 = vsel %vm123, %v358, 0
    %v371 = vsel %vm123, %v359, 0
    %v374 = vsel %vm123, %v360, 0
    %376 = vmatprep.subr.bf16.mxu0 %v368
    %377 = vmatpush1.bf16.msra.mxu0 %v365
    %378 = vmatprep.subr.bf16.mxu0 0
    %379 = vmatpush1.bf16.msra.mxu0 0
    %380 = vmatprep.subr.bf16.mxu0 0
    %381 = vmatpush1.bf16.msra.mxu0 0
    %382 = vmatprep.subr.bf16.mxu0 0
    %383 = vmatpush1.bf16.msra.mxu0 0
    %384 = vmatprep.subr.bf16.mxu0 0
    %385 = vmatpush1.bf16.msra.mxu0 0
    %386 = vmatprep.subr.bf16.mxu0 0
    %387 = vmatpush1.bf16.msra.mxu0 0
    %388 = vmatprep.subr.bf16.mxu0 0
    %389 = vmatpush1.bf16.msra.mxu0 0
    %390 = vmatprep.subr.bf16.mxu0 0
    %391 = vmatpush1.bf16.msra.mxu0 0
    %392 = vmatprep.subr.bf16.mxu0 0
    %393 = vmatpush1.bf16.msra.mxu0 0
    %394 = vmatprep.subr.bf16.mxu0 0
    %395 = vmatpush1.bf16.msra.mxu0 0
    %396 = vmatprep.subr.bf16.mxu0 0
    %397 = vmatpush1.bf16.msra.mxu0 0
    %398 = vmatprep.subr.bf16.mxu0 0
    %399 = vmatpush1.bf16.msra.mxu0 0
    %400 = vmatprep.subr.bf16.mxu0 0
    %401 = vmatpush1.bf16.msra.mxu0 0
    %402 = vmatprep.subr.bf16.mxu0 0
    %403 = vmatpush1.bf16.msra.mxu0 0
    %404 = vmatprep.subr.bf16.mxu0 0
    %405 = vmatpush1.bf16.msra.mxu0 0
    %406 = vmatprep.subr.bf16.mxu0 0
    %407 = vmatpush1.bf16.msra.mxu0 0
    %408 = vmatprep.mubr.bf16.mxu0 0
    %409 = vmatmul.mubr.bf16.gmra.mrb[0].mxu0 %v362
    %v410 = vpop.f32.mrb[0].mxu0
    %v411 = vadd.f32 0.0, %v410
    %v412 = vpop.f32.mrb[0].mxu0
    %v413 = vadd.f32 0.0, %v412
    %v414 = vpop.f32.mrb[0].mxu0
    %v415 = vpop.f32.mrb[0].mxu0
    %416 = vdwg.mxu0
    %417 = vmatprep.subr.bf16.mxu0 %v374
    %418 = vmatpush1.bf16.msra.mxu0 %v371
    %419 = vmatprep.subr.bf16.mxu0 0
    %420 = vmatpush1.bf16.msra.mxu0 0
    %421 = vmatprep.subr.bf16.mxu0 0
    %422 = vmatpush1.bf16.msra.mxu0 0
    %423 = vmatprep.subr.bf16.mxu0 0
    %424 = vmatpush1.bf16.msra.mxu0 0
    %425 = vmatprep.subr.bf16.mxu0 0
    %426 = vmatpush1.bf16.msra.mxu0 0
    %427 = vmatprep.subr.bf16.mxu0 0
    %428 = vmatpush1.bf16.msra.mxu0 0
    %429 = vmatprep.subr.bf16.mxu0 0
    %430 = vmatpush1.bf16.msra.mxu0 0
    %431 = vmatprep.subr.bf16.mxu0 0
    %432 = vmatpush1.bf16.msra.mxu0 0
    %433 = vmatprep.subr.bf16.mxu0 0
    %434 = vmatpush1.bf16.msra.mxu0 0
    %435 = vmatprep.subr.bf16.mxu0 0
    %436 = vmatpush1.bf16.msra.mxu0 0
    %437 = vmatprep.subr.bf16.mxu0 0
    %438 = vmatpush1.bf16.msra.mxu0 0
    %439 = vmatprep.subr.bf16.mxu0 0
    %440 = vmatpush1.bf16.msra.mxu0 0
    %441 = vmatprep.subr.bf16.mxu0 0
    %442 = vmatpush1.bf16.msra.mxu0 0
    %443 = vmatprep.subr.bf16.mxu0 0
    %444 = vmatpush1.bf16.msra.mxu0 0
    %445 = vmatprep.subr.bf16.mxu0 0
    %446 = vmatpush1.bf16.msra.mxu0 0
    %447 = vmatprep.subr.bf16.mxu0 0
    %448 = vmatpush1.bf16.msra.mxu0 0
    %449 = vmatprep.mubr.bf16.mxu0 0
    %450 = vmatmul.mubr.bf16.gmra.mrb[0].mxu0 %v362
    %v451 = vpop.f32.mrb[0].mxu0
    %v452 = vadd.f32 0.0, %v451
    %v453 = vpop.f32.mrb[0].mxu0
    %v454 = vadd.f32 0.0, %v453
    %v455 = vpop.f32.mrb[0].mxu0
    %v456 = vpop.f32.mrb[0].mxu0
    %457 = vdwg.mxu0
    %v458 = vadd.f32 %v268, %v411
    %v459 = vadd.f32 %v270, %v413
    %v460 = vadd.f32 %v309, %v452
    %v461 = vadd.f32 %v311, %v454
    %462 = vrot.lane.b32.xlu0 %v19, 1
    %v463 = vpop.permute.xlu0 %462
    %464 = vrot.lane.b32.xlu0 %v23, 1
    %v465 = vpop.permute.xlu0 %464
    %466 = vrot.lane.b32.xlu0 %v20, 1
    %v467 = vpop.permute.xlu0 %466
    %468 = vrot.lane.b32.xlu0 %v24, 1
    %v469 = vpop.permute.xlu0 %468
    %vm470 = vcmp.lt.s32.totalorder %v36, 1
    %v471 = vsel %vm470, %v467, %v469
    %v472 = vsel %vm470, %v465, %v467
    %v473 = vsel %vm470, %v463, %v465
    %v474 = vsel %vm470, %v469, %v463
    %s475 = scalar_lea.vmem %s3, 12
    %v476 = vld [vmem:[%s475] sm:$0xf]
    %v478 = vlaneseq
    %v479 = vshrl.u32 %v478, 7
    %v480 = vsub.s32 0, %v479
    %v481 = vrot.slane %v476, %v480
    %v482 = vlaneseq
    %v483 = vshrl.u32 %v482, 7
    %v484 = vsub.s32 1, %v483
    %v485 = vrot.slane %v476, %v484
    %v486 = vlaneseq
    %v487 = vshrl.u32 %v486, 7
    %v488 = vsub.s32 2, %v487
    %v489 = vrot.slane %v476, %v488
    %v490 = vlaneseq
    %v491 = vshrl.u32 %v490, 7
    %v492 = vsub.s32 3, %v491
    %v493 = vrot.slane %v476, %v492
    %v498 = vmul.f32 %v474, %v481
    %v499 = vmul.f32 %v473, %v485
    %v500 = vmul.f32 %v472, %v489
    %v501 = vmul.f32 %v471, %v493
    %s502 = scalar_lea.vmem %s1, 12
    %v503 = vld [vmem:[%s502] sm:$0xf]
    %v504 = vpack.c.bf16 %v498, %v498
    %v505 = vpack.c.bf16 %v499, %v499
    %v506 = vpack.c.bf16 %v500, %v500
    %v507 = vpack.c.bf16 %v501, %v501
    %v509 = vsel %vm119, %v503, 0
    %v512 = vsel %vm123, %v504, 0
    %v515 = vsel %vm123, %v505, 0
    %v518 = vsel %vm123, %v506, 0
    %v521 = vsel %vm123, %v507, 0
    %523 = vmatprep.subr.bf16.mxu0 %v515
    %524 = vmatpush1.bf16.msra.mxu0 %v512
    %525 = vmatprep.subr.bf16.mxu0 0
    %526 = vmatpush1.bf16.msra.mxu0 0
    %527 = vmatprep.subr.bf16.mxu0 0
    %528 = vmatpush1.bf16.msra.mxu0 0
    %529 = vmatprep.subr.bf16.mxu0 0
    %530 = vmatpush1.bf16.msra.mxu0 0
    %531 = vmatprep.subr.bf16.mxu0 0
    %532 = vmatpush1.bf16.msra.mxu0 0
    %533 = vmatprep.subr.bf16.mxu0 0
    %534 = vmatpush1.bf16.msra.mxu0 0
    %535 = vmatprep.subr.bf16.mxu0 0
    %536 = vmatpush1.bf16.msra.mxu0 0
    %537 = vmatprep.subr.bf16.mxu0 0
    %538 = vmatpush1.bf16.msra.mxu0 0
    %539 = vmatprep.subr.bf16.mxu0 0
    %540 = vmatpush1.bf16.msra.mxu0 0
    %541 = vmatprep.subr.bf16.mxu0 0
    %542 = vmatpush1.bf16.msra.mxu0 0
    %543 = vmatprep.subr.bf16.mxu0 0
    %544 = vmatpush1.bf16.msra.mxu0 0
    %545 = vmatprep.subr.bf16.mxu0 0
    %546 = vmatpush1.bf16.msra.mxu0 0
    %547 = vmatprep.subr.bf16.mxu0 0
    %548 = vmatpush1.bf16.msra.mxu0 0
    %549 = vmatprep.subr.bf16.mxu0 0
    %550 = vmatpush1.bf16.msra.mxu0 0
    %551 = vmatprep.subr.bf16.mxu0 0
    %552 = vmatpush1.bf16.msra.mxu0 0
    %553 = vmatprep.subr.bf16.mxu0 0
    %554 = vmatpush1.bf16.msra.mxu0 0
    %555 = vmatprep.mubr.bf16.mxu0 0
    %556 = vmatmul.mubr.bf16.gmra.mrb[0].mxu0 %v509
    %v557 = vpop.f32.mrb[0].mxu0
    %v558 = vadd.f32 0.0, %v557
    %v559 = vpop.f32.mrb[0].mxu0
    %v560 = vadd.f32 0.0, %v559
    %v561 = vpop.f32.mrb[0].mxu0
    %v562 = vpop.f32.mrb[0].mxu0
    %563 = vdwg.mxu0
    %564 = vmatprep.subr.bf16.mxu0 %v521
    %565 = vmatpush1.bf16.msra.mxu0 %v518
    %566 = vmatprep.subr.bf16.mxu0 0
    %567 = vmatpush1.bf16.msra.mxu0 0
    %568 = vmatprep.subr.bf16.mxu0 0
    %569 = vmatpush1.bf16.msra.mxu0 0
    %570 = vmatprep.subr.bf16.mxu0 0
    %571 = vmatpush1.bf16.msra.mxu0 0
    %572 = vmatprep.subr.bf16.mxu0 0
    %573 = vmatpush1.bf16.msra.mxu0 0
    %574 = vmatprep.subr.bf16.mxu0 0
    %575 = vmatpush1.bf16.msra.mxu0 0
    %576 = vmatprep.subr.bf16.mxu0 0
    %577 = vmatpush1.bf16.msra.mxu0 0
    %578 = vmatprep.subr.bf16.mxu0 0
    %579 = vmatpush1.bf16.msra.mxu0 0
    %580 = vmatprep.subr.bf16.mxu0 0
    %581 = vmatpush1.bf16.msra.mxu0 0
    %582 = vmatprep.subr.bf16.mxu0 0
    %583 = vmatpush1.bf16.msra.mxu0 0
    %584 = vmatprep.subr.bf16.mxu0 0
    %585 = vmatpush1.bf16.msra.mxu0 0
    %586 = vmatprep.subr.bf16.mxu0 0
    %587 = vmatpush1.bf16.msra.mxu0 0
    %588 = vmatprep.subr.bf16.mxu0 0
    %589 = vmatpush1.bf16.msra.mxu0 0
    %590 = vmatprep.subr.bf16.mxu0 0
    %591 = vmatpush1.bf16.msra.mxu0 0
    %592 = vmatprep.subr.bf16.mxu0 0
    %593 = vmatpush1.bf16.msra.mxu0 0
    %594 = vmatprep.subr.bf16.mxu0 0
    %595 = vmatpush1.bf16.msra.mxu0 0
    %596 = vmatprep.mubr.bf16.mxu0 0
    %597 = vmatmul.mubr.bf16.gmra.mrb[0].mxu0 %v509
    %v598 = vpop.f32.mrb[0].mxu0
    %v599 = vadd.f32 0.0, %v598
    %v600 = vpop.f32.mrb[0].mxu0
    %v601 = vadd.f32 0.0, %v600
    %v602 = vpop.f32.mrb[0].mxu0
    %v603 = vpop.f32.mrb[0].mxu0
    %604 = vdwg.mxu0
    %v605 = vadd.f32 %v458, %v558
    %v606 = vadd.f32 %v459, %v560
    %v607 = vadd.f32 %v460, %v599
    %v608 = vadd.f32 %v461, %v601
    %s609 = scalar_lea.vmem %s1, 16
    %v610 = vld [vmem:[%s609] sm:$0xf]
    %v611 = vpack.c.bf16 %v19, %v19
    %v612 = vpack.c.bf16 %v23, %v23
    %v613 = vpack.c.bf16 %v20, %v20
    %v614 = vpack.c.bf16 %v24, %v24
    %v616 = vsel %vm119, %v610, 0
    %v619 = vsel %vm123, %v611, 0
    %v622 = vsel %vm123, %v612, 0
    %v625 = vsel %vm123, %v613, 0
    %v628 = vsel %vm123, %v614, 0
    %630 = vmatprep.subr.bf16.mxu0 %v622
    %631 = vmatpush1.bf16.msra.mxu0 %v619
    %632 = vmatprep.subr.bf16.mxu0 0
    %633 = vmatpush1.bf16.msra.mxu0 0
    %634 = vmatprep.subr.bf16.mxu0 0
    %635 = vmatpush1.bf16.msra.mxu0 0
    %636 = vmatprep.subr.bf16.mxu0 0
    %637 = vmatpush1.bf16.msra.mxu0 0
    %638 = vmatprep.subr.bf16.mxu0 0
    %639 = vmatpush1.bf16.msra.mxu0 0
    %640 = vmatprep.subr.bf16.mxu0 0
    %641 = vmatpush1.bf16.msra.mxu0 0
    %642 = vmatprep.subr.bf16.mxu0 0
    %643 = vmatpush1.bf16.msra.mxu0 0
    %644 = vmatprep.subr.bf16.mxu0 0
    %645 = vmatpush1.bf16.msra.mxu0 0
    %646 = vmatprep.subr.bf16.mxu0 0
    %647 = vmatpush1.bf16.msra.mxu0 0
    %648 = vmatprep.subr.bf16.mxu0 0
    %649 = vmatpush1.bf16.msra.mxu0 0
    %650 = vmatprep.subr.bf16.mxu0 0
    %651 = vmatpush1.bf16.msra.mxu0 0
    %652 = vmatprep.subr.bf16.mxu0 0
    %653 = vmatpush1.bf16.msra.mxu0 0
    %654 = vmatprep.subr.bf16.mxu0 0
    %655 = vmatpush1.bf16.msra.mxu0 0
    %656 = vmatprep.subr.bf16.mxu0 0
    %657 = vmatpush1.bf16.msra.mxu0 0
    %658 = vmatprep.subr.bf16.mxu0 0
    %659 = vmatpush1.bf16.msra.mxu0 0
    %660 = vmatprep.subr.bf16.mxu0 0
    %661 = vmatpush1.bf16.msra.mxu0 0
    %662 = vmatprep.mubr.bf16.mxu0 0
    %663 = vmatmul.mubr.bf16.gmra.mrb[0].mxu0 %v616
    %v664 = vpop.f32.mrb[0].mxu0
    %v665 = vadd.f32 0.0, %v664
    %v666 = vpop.f32.mrb[0].mxu0
    %v667 = vadd.f32 0.0, %v666
    %v668 = vpop.f32.mrb[0].mxu0
    %v669 = vpop.f32.mrb[0].mxu0
    %670 = vdwg.mxu0
    %671 = vmatprep.subr.bf16.mxu0 %v628
    %672 = vmatpush1.bf16.msra.mxu0 %v625
    %673 = vmatprep.subr.bf16.mxu0 0
    %674 = vmatpush1.bf16.msra.mxu0 0
    %675 = vmatprep.subr.bf16.mxu0 0
    %676 = vmatpush1.bf16.msra.mxu0 0
    %677 = vmatprep.subr.bf16.mxu0 0
    %678 = vmatpush1.bf16.msra.mxu0 0
    %679 = vmatprep.subr.bf16.mxu0 0
    %680 = vmatpush1.bf16.msra.mxu0 0
    %681 = vmatprep.subr.bf16.mxu0 0
    %682 = vmatpush1.bf16.msra.mxu0 0
    %683 = vmatprep.subr.bf16.mxu0 0
    %684 = vmatpush1.bf16.msra.mxu0 0
    %685 = vmatprep.subr.bf16.mxu0 0
    %686 = vmatpush1.bf16.msra.mxu0 0
    %687 = vmatprep.subr.bf16.mxu0 0
    %688 = vmatpush1.bf16.msra.mxu0 0
    %689 = vmatprep.subr.bf16.mxu0 0
    %690 = vmatpush1.bf16.msra.mxu0 0
    %691 = vmatprep.subr.bf16.mxu0 0
    %692 = vmatpush1.bf16.msra.mxu0 0
    %693 = vmatprep.subr.bf16.mxu0 0
    %694 = vmatpush1.bf16.msra.mxu0 0
    %695 = vmatprep.subr.bf16.mxu0 0
    %696 = vmatpush1.bf16.msra.mxu0 0
    %697 = vmatprep.subr.bf16.mxu0 0
    %698 = vmatpush1.bf16.msra.mxu0 0
    %699 = vmatprep.subr.bf16.mxu0 0
    %700 = vmatpush1.bf16.msra.mxu0 0
    %701 = vmatprep.subr.bf16.mxu0 0
    %702 = vmatpush1.bf16.msra.mxu0 0
    %703 = vmatprep.mubr.bf16.mxu0 0
    %704 = vmatmul.mubr.bf16.gmra.mrb[0].mxu0 %v616
    %v705 = vpop.f32.mrb[0].mxu0
    %v706 = vadd.f32 0.0, %v705
    %v707 = vpop.f32.mrb[0].mxu0
    %v708 = vadd.f32 0.0, %v707
    %v709 = vpop.f32.mrb[0].mxu0
    %v710 = vpop.f32.mrb[0].mxu0
    %711 = vdwg.mxu0
    %v712 = vadd.f32 %v605, %v665
    %v713 = vadd.f32 %v606, %v667
    %v714 = vadd.f32 %v607, %v706
    %v715 = vadd.f32 %v608, %v708
    %716 = vrot.lane.b32.xlu0 %v19, 127
    %v717 = vpop.permute.xlu0 %716
    %718 = vrot.lane.b32.xlu0 %v23, 127
    %v719 = vpop.permute.xlu0 %718
    %720 = vrot.lane.b32.xlu0 %v20, 127
    %v721 = vpop.permute.xlu0 %720
    %722 = vrot.lane.b32.xlu0 %v24, 127
    %v723 = vpop.permute.xlu0 %722
    %vm724 = vcmp.lt.s32.totalorder %v36, 127
    %v725 = vsel %vm724, %v721, %v723
    %v726 = vsel %vm724, %v719, %v721
    %v727 = vsel %vm724, %v717, %v719
    %v728 = vsel %vm724, %v723, %v717
    %s729 = scalar_lea.vmem %s3, 20
    %v730 = vld [vmem:[%s729] sm:$0xf]
    %v732 = vlaneseq
    %v733 = vshrl.u32 %v732, 7
    %v734 = vsub.s32 0, %v733
    %v735 = vrot.slane %v730, %v734
    %v736 = vlaneseq
    %v737 = vshrl.u32 %v736, 7
    %v738 = vsub.s32 1, %v737
    %v739 = vrot.slane %v730, %v738
    %v740 = vlaneseq
    %v741 = vshrl.u32 %v740, 7
    %v742 = vsub.s32 2, %v741
    %v743 = vrot.slane %v730, %v742
    %v744 = vlaneseq
    %v745 = vshrl.u32 %v744, 7
    %v746 = vsub.s32 3, %v745
    %v747 = vrot.slane %v730, %v746
    %v752 = vmul.f32 %v727, %v735
    %v753 = vmul.f32 %v726, %v739
    %v754 = vmul.f32 %v725, %v743
    %v755 = vmul.f32 %v728, %v747
    %s756 = scalar_lea.vmem %s1, 20
    %v757 = vld [vmem:[%s756] sm:$0xf]
    %v758 = vpack.c.bf16 %v752, %v752
    %v759 = vpack.c.bf16 %v753, %v753
    %v760 = vpack.c.bf16 %v754, %v754
    %v761 = vpack.c.bf16 %v755, %v755
    %v763 = vsel %vm119, %v757, 0
    %v766 = vsel %vm123, %v758, 0
    %v769 = vsel %vm123, %v759, 0
    %v772 = vsel %vm123, %v760, 0
    %v775 = vsel %vm123, %v761, 0
    %777 = vmatprep.subr.bf16.mxu0 %v769
    %778 = vmatpush1.bf16.msra.mxu0 %v766
    %779 = vmatprep.subr.bf16.mxu0 0
    %780 = vmatpush1.bf16.msra.mxu0 0
    %781 = vmatprep.subr.bf16.mxu0 0
    %782 = vmatpush1.bf16.msra.mxu0 0
    %783 = vmatprep.subr.bf16.mxu0 0
    %784 = vmatpush1.bf16.msra.mxu0 0
    %785 = vmatprep.subr.bf16.mxu0 0
    %786 = vmatpush1.bf16.msra.mxu0 0
    %787 = vmatprep.subr.bf16.mxu0 0
    %788 = vmatpush1.bf16.msra.mxu0 0
    %789 = vmatprep.subr.bf16.mxu0 0
    %790 = vmatpush1.bf16.msra.mxu0 0
    %791 = vmatprep.subr.bf16.mxu0 0
    %792 = vmatpush1.bf16.msra.mxu0 0
    %793 = vmatprep.subr.bf16.mxu0 0
    %794 = vmatpush1.bf16.msra.mxu0 0
    %795 = vmatprep.subr.bf16.mxu0 0
    %796 = vmatpush1.bf16.msra.mxu0 0
    %797 = vmatprep.subr.bf16.mxu0 0
    %798 = vmatpush1.bf16.msra.mxu0 0
    %799 = vmatprep.subr.bf16.mxu0 0
    %800 = vmatpush1.bf16.msra.mxu0 0
    %801 = vmatprep.subr.bf16.mxu0 0
    %802 = vmatpush1.bf16.msra.mxu0 0
    %803 = vmatprep.subr.bf16.mxu0 0
    %804 = vmatpush1.bf16.msra.mxu0 0
    %805 = vmatprep.subr.bf16.mxu0 0
    %806 = vmatpush1.bf16.msra.mxu0 0
    %807 = vmatprep.subr.bf16.mxu0 0
    %808 = vmatpush1.bf16.msra.mxu0 0
    %809 = vmatprep.mubr.bf16.mxu0 0
    %810 = vmatmul.mubr.bf16.gmra.mrb[0].mxu0 %v763
    %v811 = vpop.f32.mrb[0].mxu0
    %v812 = vadd.f32 0.0, %v811
    %v813 = vpop.f32.mrb[0].mxu0
    %v814 = vadd.f32 0.0, %v813
    %v815 = vpop.f32.mrb[0].mxu0
    %v816 = vpop.f32.mrb[0].mxu0
    %817 = vdwg.mxu0
    %818 = vmatprep.subr.bf16.mxu0 %v775
    %819 = vmatpush1.bf16.msra.mxu0 %v772
    %820 = vmatprep.subr.bf16.mxu0 0
    %821 = vmatpush1.bf16.msra.mxu0 0
    %822 = vmatprep.subr.bf16.mxu0 0
    %823 = vmatpush1.bf16.msra.mxu0 0
    %824 = vmatprep.subr.bf16.mxu0 0
    %825 = vmatpush1.bf16.msra.mxu0 0
    %826 = vmatprep.subr.bf16.mxu0 0
    %827 = vmatpush1.bf16.msra.mxu0 0
    %828 = vmatprep.subr.bf16.mxu0 0
    %829 = vmatpush1.bf16.msra.mxu0 0
    %830 = vmatprep.subr.bf16.mxu0 0
    %831 = vmatpush1.bf16.msra.mxu0 0
    %832 = vmatprep.subr.bf16.mxu0 0
    %833 = vmatpush1.bf16.msra.mxu0 0
    %834 = vmatprep.subr.bf16.mxu0 0
    %835 = vmatpush1.bf16.msra.mxu0 0
    %836 = vmatprep.subr.bf16.mxu0 0
    %837 = vmatpush1.bf16.msra.mxu0 0
    %838 = vmatprep.subr.bf16.mxu0 0
    %839 = vmatpush1.bf16.msra.mxu0 0
    %840 = vmatprep.subr.bf16.mxu0 0
    %841 = vmatpush1.bf16.msra.mxu0 0
    %842 = vmatprep.subr.bf16.mxu0 0
    %843 = vmatpush1.bf16.msra.mxu0 0
    %844 = vmatprep.subr.bf16.mxu0 0
    %845 = vmatpush1.bf16.msra.mxu0 0
    %846 = vmatprep.subr.bf16.mxu0 0
    %847 = vmatpush1.bf16.msra.mxu0 0
    %848 = vmatprep.subr.bf16.mxu0 0
    %849 = vmatpush1.bf16.msra.mxu0 0
    %850 = vmatprep.mubr.bf16.mxu0 0
    %851 = vmatmul.mubr.bf16.gmra.mrb[0].mxu0 %v763
    %v852 = vpop.f32.mrb[0].mxu0
    %v853 = vadd.f32 0.0, %v852
    %v854 = vpop.f32.mrb[0].mxu0
    %v855 = vadd.f32 0.0, %v854
    %v856 = vpop.f32.mrb[0].mxu0
    %v857 = vpop.f32.mrb[0].mxu0
    %858 = vdwg.mxu0
    %v859 = vadd.f32 %v712, %v812
    %v860 = vadd.f32 %v713, %v814
    %v861 = vadd.f32 %v714, %v853
    %v862 = vadd.f32 %v715, %v855
    %863 = vrot.lane.b32.xlu0 %v19, 113
    %v864 = vpop.permute.xlu0 %863
    %865 = vrot.lane.b32.xlu0 %v23, 113
    %v866 = vpop.permute.xlu0 %865
    %867 = vrot.lane.b32.xlu0 %v20, 113
    %v868 = vpop.permute.xlu0 %867
    %869 = vrot.lane.b32.xlu0 %v24, 113
    %v870 = vpop.permute.xlu0 %869
    %vm871 = vcmp.lt.s32.totalorder %v36, 113
    %v872 = vsel %vm871, %v868, %v870
    %v873 = vsel %vm871, %v866, %v868
    %v874 = vsel %vm871, %v864, %v866
    %v875 = vsel %vm871, %v870, %v864
    %s876 = scalar_lea.vmem %s3, 24
    %v877 = vld [vmem:[%s876] sm:$0xf]
    %v879 = vlaneseq
    %v880 = vshrl.u32 %v879, 7
    %v881 = vsub.s32 0, %v880
    %v882 = vrot.slane %v877, %v881
    %v883 = vlaneseq
    %v884 = vshrl.u32 %v883, 7
    %v885 = vsub.s32 1, %v884
    %v886 = vrot.slane %v877, %v885
    %v887 = vlaneseq
    %v888 = vshrl.u32 %v887, 7
    %v889 = vsub.s32 2, %v888
    %v890 = vrot.slane %v877, %v889
    %v891 = vlaneseq
    %v892 = vshrl.u32 %v891, 7
    %v893 = vsub.s32 3, %v892
    %v894 = vrot.slane %v877, %v893
    %v899 = vmul.f32 %v874, %v882
    %v900 = vmul.f32 %v873, %v886
    %v901 = vmul.f32 %v872, %v890
    %v902 = vmul.f32 %v875, %v894
    %s903 = scalar_lea.vmem %s1, 24
    %v904 = vld [vmem:[%s903] sm:$0xf]
    %v905 = vpack.c.bf16 %v899, %v899
    %v906 = vpack.c.bf16 %v900, %v900
    %v907 = vpack.c.bf16 %v901, %v901
    %v908 = vpack.c.bf16 %v902, %v902
    %v910 = vsel %vm119, %v904, 0
    %v913 = vsel %vm123, %v905, 0
    %v916 = vsel %vm123, %v906, 0
    %v919 = vsel %vm123, %v907, 0
    %v922 = vsel %vm123, %v908, 0
    %924 = vmatprep.subr.bf16.mxu0 %v916
    %925 = vmatpush1.bf16.msra.mxu0 %v913
    %926 = vmatprep.subr.bf16.mxu0 0
    %927 = vmatpush1.bf16.msra.mxu0 0
    %928 = vmatprep.subr.bf16.mxu0 0
    %929 = vmatpush1.bf16.msra.mxu0 0
    %930 = vmatprep.subr.bf16.mxu0 0
    %931 = vmatpush1.bf16.msra.mxu0 0
    %932 = vmatprep.subr.bf16.mxu0 0
    %933 = vmatpush1.bf16.msra.mxu0 0
    %934 = vmatprep.subr.bf16.mxu0 0
    %935 = vmatpush1.bf16.msra.mxu0 0
    %936 = vmatprep.subr.bf16.mxu0 0
    %937 = vmatpush1.bf16.msra.mxu0 0
    %938 = vmatprep.subr.bf16.mxu0 0
    %939 = vmatpush1.bf16.msra.mxu0 0
    %940 = vmatprep.subr.bf16.mxu0 0
    %941 = vmatpush1.bf16.msra.mxu0 0
    %942 = vmatprep.subr.bf16.mxu0 0
    %943 = vmatpush1.bf16.msra.mxu0 0
    %944 = vmatprep.subr.bf16.mxu0 0
    %945 = vmatpush1.bf16.msra.mxu0 0
    %946 = vmatprep.subr.bf16.mxu0 0
    %947 = vmatpush1.bf16.msra.mxu0 0
    %948 = vmatprep.subr.bf16.mxu0 0
    %949 = vmatpush1.bf16.msra.mxu0 0
    %950 = vmatprep.subr.bf16.mxu0 0
    %951 = vmatpush1.bf16.msra.mxu0 0
    %952 = vmatprep.subr.bf16.mxu0 0
    %953 = vmatpush1.bf16.msra.mxu0 0
    %954 = vmatprep.subr.bf16.mxu0 0
    %955 = vmatpush1.bf16.msra.mxu0 0
    %956 = vmatprep.mubr.bf16.mxu0 0
    %957 = vmatmul.mubr.bf16.gmra.mrb[0].mxu0 %v910
    %v958 = vpop.f32.mrb[0].mxu0
    %v959 = vadd.f32 0.0, %v958
    %v960 = vpop.f32.mrb[0].mxu0
    %v961 = vadd.f32 0.0, %v960
    %v962 = vpop.f32.mrb[0].mxu0
    %v963 = vpop.f32.mrb[0].mxu0
    %964 = vdwg.mxu0
    %965 = vmatprep.subr.bf16.mxu0 %v922
    %966 = vmatpush1.bf16.msra.mxu0 %v919
    %967 = vmatprep.subr.bf16.mxu0 0
    %968 = vmatpush1.bf16.msra.mxu0 0
    %969 = vmatprep.subr.bf16.mxu0 0
    %970 = vmatpush1.bf16.msra.mxu0 0
    %971 = vmatprep.subr.bf16.mxu0 0
    %972 = vmatpush1.bf16.msra.mxu0 0
    %973 = vmatprep.subr.bf16.mxu0 0
    %974 = vmatpush1.bf16.msra.mxu0 0
    %975 = vmatprep.subr.bf16.mxu0 0
    %976 = vmatpush1.bf16.msra.mxu0 0
    %977 = vmatprep.subr.bf16.mxu0 0
    %978 = vmatpush1.bf16.msra.mxu0 0
    %979 = vmatprep.subr.bf16.mxu0 0
    %980 = vmatpush1.bf16.msra.mxu0 0
    %981 = vmatprep.subr.bf16.mxu0 0
    %982 = vmatpush1.bf16.msra.mxu0 0
    %983 = vmatprep.subr.bf16.mxu0 0
    %984 = vmatpush1.bf16.msra.mxu0 0
    %985 = vmatprep.subr.bf16.mxu0 0
    %986 = vmatpush1.bf16.msra.mxu0 0
    %987 = vmatprep.subr.bf16.mxu0 0
    %988 = vmatpush1.bf16.msra.mxu0 0
    %989 = vmatprep.subr.bf16.mxu0 0
    %990 = vmatpush1.bf16.msra.mxu0 0
    %991 = vmatprep.subr.bf16.mxu0 0
    %992 = vmatpush1.bf16.msra.mxu0 0
    %993 = vmatprep.subr.bf16.mxu0 0
    %994 = vmatpush1.bf16.msra.mxu0 0
    %995 = vmatprep.subr.bf16.mxu0 0
    %996 = vmatpush1.bf16.msra.mxu0 0
    %997 = vmatprep.mubr.bf16.mxu0 0
    %998 = vmatmul.mubr.bf16.gmra.mrb[0].mxu0 %v910
    %v999 = vpop.f32.mrb[0].mxu0
    %v1000 = vadd.f32 0.0, %v999
    %v1001 = vpop.f32.mrb[0].mxu0
    %v1002 = vadd.f32 0.0, %v1001
    %v1003 = vpop.f32.mrb[0].mxu0
    %v1004 = vpop.f32.mrb[0].mxu0
    %1005 = vdwg.mxu0
    %v1006 = vadd.f32 %v859, %v959
    %v1007 = vadd.f32 %v860, %v961
    %v1008 = vadd.f32 %v861, %v1000
    %v1009 = vadd.f32 %v862, %v1002
    %1010 = vrot.lane.b32.xlu0 %v19, 112
    %v1011 = vpop.permute.xlu0 %1010
    %1012 = vrot.lane.b32.xlu0 %v23, 112
    %v1013 = vpop.permute.xlu0 %1012
    %1014 = vrot.lane.b32.xlu0 %v20, 112
    %v1015 = vpop.permute.xlu0 %1014
    %1016 = vrot.lane.b32.xlu0 %v24, 112
    %v1017 = vpop.permute.xlu0 %1016
    %vm1018 = vcmp.lt.s32.totalorder %v36, 112
    %v1019 = vsel %vm1018, %v1015, %v1017
    %v1020 = vsel %vm1018, %v1013, %v1015
    %v1021 = vsel %vm1018, %v1011, %v1013
    %v1022 = vsel %vm1018, %v1017, %v1011
    %s1023 = scalar_lea.vmem %s3, 28
    %v1024 = vld [vmem:[%s1023] sm:$0xf]
    %v1026 = vlaneseq
    %v1027 = vshrl.u32 %v1026, 7
    %v1028 = vsub.s32 0, %v1027
    %v1029 = vrot.slane %v1024, %v1028
    %v1030 = vlaneseq
    %v1031 = vshrl.u32 %v1030, 7
    %v1032 = vsub.s32 1, %v1031
    %v1033 = vrot.slane %v1024, %v1032
    %v1034 = vlaneseq
    %v1035 = vshrl.u32 %v1034, 7
    %v1036 = vsub.s32 2, %v1035
    %v1037 = vrot.slane %v1024, %v1036
    %v1038 = vlaneseq
    %v1039 = vshrl.u32 %v1038, 7
    %v1040 = vsub.s32 3, %v1039
    %v1041 = vrot.slane %v1024, %v1040
    %v1046 = vmul.f32 %v1021, %v1029
    %v1047 = vmul.f32 %v1020, %v1033
    %v1048 = vmul.f32 %v1019, %v1037
    %v1049 = vmul.f32 %v1022, %v1041
    %s1050 = scalar_lea.vmem %s1, 28
    %v1051 = vld [vmem:[%s1050] sm:$0xf]
    %v1052 = vpack.c.bf16 %v1046, %v1046
    %v1053 = vpack.c.bf16 %v1047, %v1047
    %v1054 = vpack.c.bf16 %v1048, %v1048
    %v1055 = vpack.c.bf16 %v1049, %v1049
    %v1057 = vsel %vm119, %v1051, 0
    %v1060 = vsel %vm123, %v1052, 0
    %v1063 = vsel %vm123, %v1053, 0
    %v1066 = vsel %vm123, %v1054, 0
    %v1069 = vsel %vm123, %v1055, 0
    %1071 = vmatprep.subr.bf16.mxu0 %v1063
    %1072 = vmatpush1.bf16.msra.mxu0 %v1060
    %1073 = vmatprep.subr.bf16.mxu0 0
    %1074 = vmatpush1.bf16.msra.mxu0 0
    %1075 = vmatprep.subr.bf16.mxu0 0
    %1076 = vmatpush1.bf16.msra.mxu0 0
    %1077 = vmatprep.subr.bf16.mxu0 0
    %1078 = vmatpush1.bf16.msra.mxu0 0
    %1079 = vmatprep.subr.bf16.mxu0 0
    %1080 = vmatpush1.bf16.msra.mxu0 0
    %1081 = vmatprep.subr.bf16.mxu0 0
    %1082 = vmatpush1.bf16.msra.mxu0 0
    %1083 = vmatprep.subr.bf16.mxu0 0
    %1084 = vmatpush1.bf16.msra.mxu0 0
    %1085 = vmatprep.subr.bf16.mxu0 0
    %1086 = vmatpush1.bf16.msra.mxu0 0
    %1087 = vmatprep.subr.bf16.mxu0 0
    %1088 = vmatpush1.bf16.msra.mxu0 0
    %1089 = vmatprep.subr.bf16.mxu0 0
    %1090 = vmatpush1.bf16.msra.mxu0 0
    %1091 = vmatprep.subr.bf16.mxu0 0
    %1092 = vmatpush1.bf16.msra.mxu0 0
    %1093 = vmatprep.subr.bf16.mxu0 0
    %1094 = vmatpush1.bf16.msra.mxu0 0
    %1095 = vmatprep.subr.bf16.mxu0 0
    %1096 = vmatpush1.bf16.msra.mxu0 0
    %1097 = vmatprep.subr.bf16.mxu0 0
    %1098 = vmatpush1.bf16.msra.mxu0 0
    %1099 = vmatprep.subr.bf16.mxu0 0
    %1100 = vmatpush1.bf16.msra.mxu0 0
    %1101 = vmatprep.subr.bf16.mxu0 0
    %1102 = vmatpush1.bf16.msra.mxu0 0
    %1103 = vmatprep.mubr.bf16.mxu0 0
    %1104 = vmatmul.mubr.bf16.gmra.mrb[0].mxu0 %v1057
    %v1105 = vpop.f32.mrb[0].mxu0
    %v1106 = vadd.f32 0.0, %v1105
    %v1107 = vpop.f32.mrb[0].mxu0
    %v1108 = vadd.f32 0.0, %v1107
    %v1109 = vpop.f32.mrb[0].mxu0
    %v1110 = vpop.f32.mrb[0].mxu0
    %1111 = vdwg.mxu0
    %1112 = vmatprep.subr.bf16.mxu0 %v1069
    %1113 = vmatpush1.bf16.msra.mxu0 %v1066
    %1114 = vmatprep.subr.bf16.mxu0 0
    %1115 = vmatpush1.bf16.msra.mxu0 0
    %1116 = vmatprep.subr.bf16.mxu0 0
    %1117 = vmatpush1.bf16.msra.mxu0 0
    %1118 = vmatprep.subr.bf16.mxu0 0
    %1119 = vmatpush1.bf16.msra.mxu0 0
    %1120 = vmatprep.subr.bf16.mxu0 0
    %1121 = vmatpush1.bf16.msra.mxu0 0
    %1122 = vmatprep.subr.bf16.mxu0 0
    %1123 = vmatpush1.bf16.msra.mxu0 0
    %1124 = vmatprep.subr.bf16.mxu0 0
    %1125 = vmatpush1.bf16.msra.mxu0 0
    %1126 = vmatprep.subr.bf16.mxu0 0
    %1127 = vmatpush1.bf16.msra.mxu0 0
    %1128 = vmatprep.subr.bf16.mxu0 0
    %1129 = vmatpush1.bf16.msra.mxu0 0
    %1130 = vmatprep.subr.bf16.mxu0 0
    %1131 = vmatpush1.bf16.msra.mxu0 0
    %1132 = vmatprep.subr.bf16.mxu0 0
    %1133 = vmatpush1.bf16.msra.mxu0 0
    %1134 = vmatprep.subr.bf16.mxu0 0
    %1135 = vmatpush1.bf16.msra.mxu0 0
    %1136 = vmatprep.subr.bf16.mxu0 0
    %1137 = vmatpush1.bf16.msra.mxu0 0
    %1138 = vmatprep.subr.bf16.mxu0 0
    %1139 = vmatpush1.bf16.msra.mxu0 0
    %1140 = vmatprep.subr.bf16.mxu0 0
    %1141 = vmatpush1.bf16.msra.mxu0 0
    %1142 = vmatprep.subr.bf16.mxu0 0
    %1143 = vmatpush1.bf16.msra.mxu0 0
    %1144 = vmatprep.mubr.bf16.mxu0 0
    %1145 = vmatmul.mubr.bf16.gmra.mrb[0].mxu0 %v1057
    %v1146 = vpop.f32.mrb[0].mxu0
    %v1147 = vadd.f32 0.0, %v1146
    %v1148 = vpop.f32.mrb[0].mxu0
    %v1149 = vadd.f32 0.0, %v1148
    %v1150 = vpop.f32.mrb[0].mxu0
    %v1151 = vpop.f32.mrb[0].mxu0
    %1152 = vdwg.mxu0
    %v1153 = vadd.f32 %v1006, %v1106
    %v1154 = vadd.f32 %v1007, %v1108
    %v1155 = vadd.f32 %v1008, %v1147
    %v1156 = vadd.f32 %v1009, %v1149
    %1157 = vrot.lane.b32.xlu0 %v19, 111
    %v1158 = vpop.permute.xlu0 %1157
    %1159 = vrot.lane.b32.xlu0 %v23, 111
    %v1160 = vpop.permute.xlu0 %1159
    %1161 = vrot.lane.b32.xlu0 %v20, 111
    %v1162 = vpop.permute.xlu0 %1161
    %1163 = vrot.lane.b32.xlu0 %v24, 111
    %v1164 = vpop.permute.xlu0 %1163
    %vm1165 = vcmp.lt.s32.totalorder %v36, 111
    %v1166 = vsel %vm1165, %v1162, %v1164
    %v1167 = vsel %vm1165, %v1160, %v1162
    %v1168 = vsel %vm1165, %v1158, %v1160
    %v1169 = vsel %vm1165, %v1164, %v1158
    %s1170 = scalar_lea.vmem %s3, 32
    %v1171 = vld [vmem:[%s1170] sm:$0xf]
    %v1173 = vlaneseq
    %v1174 = vshrl.u32 %v1173, 7
    %v1175 = vsub.s32 0, %v1174
    %v1176 = vrot.slane %v1171, %v1175
    %v1177 = vlaneseq
    %v1178 = vshrl.u32 %v1177, 7
    %v1179 = vsub.s32 1, %v1178
    %v1180 = vrot.slane %v1171, %v1179
    %v1181 = vlaneseq
    %v1182 = vshrl.u32 %v1181, 7
    %v1183 = vsub.s32 2, %v1182
    %v1184 = vrot.slane %v1171, %v1183
    %v1185 = vlaneseq
    %v1186 = vshrl.u32 %v1185, 7
    %v1187 = vsub.s32 3, %v1186
    %v1188 = vrot.slane %v1171, %v1187
    %v1193 = vmul.f32 %v1168, %v1176
    %v1194 = vmul.f32 %v1167, %v1180
    %v1195 = vmul.f32 %v1166, %v1184
    %v1196 = vmul.f32 %v1169, %v1188
    %s1197 = scalar_lea.vmem %s1, 32
    %v1198 = vld [vmem:[%s1197] sm:$0xf]
    %v1199 = vpack.c.bf16 %v1193, %v1193
    %v1200 = vpack.c.bf16 %v1194, %v1194
    %v1201 = vpack.c.bf16 %v1195, %v1195
    %v1202 = vpack.c.bf16 %v1196, %v1196
    %v1204 = vsel %vm119, %v1198, 0
    %v1207 = vsel %vm123, %v1199, 0
    %v1210 = vsel %vm123, %v1200, 0
    %v1213 = vsel %vm123, %v1201, 0
    %v1216 = vsel %vm123, %v1202, 0
    %1218 = vmatprep.subr.bf16.mxu0 %v1210
    %1219 = vmatpush1.bf16.msra.mxu0 %v1207
    %1220 = vmatprep.subr.bf16.mxu0 0
    %1221 = vmatpush1.bf16.msra.mxu0 0
    %1222 = vmatprep.subr.bf16.mxu0 0
    %1223 = vmatpush1.bf16.msra.mxu0 0
    %1224 = vmatprep.subr.bf16.mxu0 0
    %1225 = vmatpush1.bf16.msra.mxu0 0
    %1226 = vmatprep.subr.bf16.mxu0 0
    %1227 = vmatpush1.bf16.msra.mxu0 0
    %1228 = vmatprep.subr.bf16.mxu0 0
    %1229 = vmatpush1.bf16.msra.mxu0 0
    %1230 = vmatprep.subr.bf16.mxu0 0
    %1231 = vmatpush1.bf16.msra.mxu0 0
    %1232 = vmatprep.subr.bf16.mxu0 0
    %1233 = vmatpush1.bf16.msra.mxu0 0
    %1234 = vmatprep.subr.bf16.mxu0 0
    %1235 = vmatpush1.bf16.msra.mxu0 0
    %1236 = vmatprep.subr.bf16.mxu0 0
    %1237 = vmatpush1.bf16.msra.mxu0 0
    %1238 = vmatprep.subr.bf16.mxu0 0
    %1239 = vmatpush1.bf16.msra.mxu0 0
    %1240 = vmatprep.subr.bf16.mxu0 0
    %1241 = vmatpush1.bf16.msra.mxu0 0
    %1242 = vmatprep.subr.bf16.mxu0 0
    %1243 = vmatpush1.bf16.msra.mxu0 0
    %1244 = vmatprep.subr.bf16.mxu0 0
    %1245 = vmatpush1.bf16.msra.mxu0 0
    %1246 = vmatprep.subr.bf16.mxu0 0
    %1247 = vmatpush1.bf16.msra.mxu0 0
    %1248 = vmatprep.subr.bf16.mxu0 0
    %1249 = vmatpush1.bf16.msra.mxu0 0
    %1250 = vmatprep.mubr.bf16.mxu0 0
    %1251 = vmatmul.mubr.bf16.gmra.mrb[0].mxu0 %v1204
    %v1252 = vpop.f32.mrb[0].mxu0
    %v1253 = vadd.f32 0.0, %v1252
    %v1254 = vpop.f32.mrb[0].mxu0
    %v1255 = vadd.f32 0.0, %v1254
    %v1256 = vpop.f32.mrb[0].mxu0
    %v1257 = vpop.f32.mrb[0].mxu0
    %1258 = vdwg.mxu0
    %1259 = vmatprep.subr.bf16.mxu0 %v1216
    %1260 = vmatpush1.bf16.msra.mxu0 %v1213
    %1261 = vmatprep.subr.bf16.mxu0 0
    %1262 = vmatpush1.bf16.msra.mxu0 0
    %1263 = vmatprep.subr.bf16.mxu0 0
    %1264 = vmatpush1.bf16.msra.mxu0 0
    %1265 = vmatprep.subr.bf16.mxu0 0
    %1266 = vmatpush1.bf16.msra.mxu0 0
    %1267 = vmatprep.subr.bf16.mxu0 0
    %1268 = vmatpush1.bf16.msra.mxu0 0
    %1269 = vmatprep.subr.bf16.mxu0 0
    %1270 = vmatpush1.bf16.msra.mxu0 0
    %1271 = vmatprep.subr.bf16.mxu0 0
    %1272 = vmatpush1.bf16.msra.mxu0 0
    %1273 = vmatprep.subr.bf16.mxu0 0
    %1274 = vmatpush1.bf16.msra.mxu0 0
    %1275 = vmatprep.subr.bf16.mxu0 0
    %1276 = vmatpush1.bf16.msra.mxu0 0
    %1277 = vmatprep.subr.bf16.mxu0 0
    %1278 = vmatpush1.bf16.msra.mxu0 0
    %1279 = vmatprep.subr.bf16.mxu0 0
    %1280 = vmatpush1.bf16.msra.mxu0 0
    %1281 = vmatprep.subr.bf16.mxu0 0
    %1282 = vmatpush1.bf16.msra.mxu0 0
    %1283 = vmatprep.subr.bf16.mxu0 0
    %1284 = vmatpush1.bf16.msra.mxu0 0
    %1285 = vmatprep.subr.bf16.mxu0 0
    %1286 = vmatpush1.bf16.msra.mxu0 0
    %1287 = vmatprep.subr.bf16.mxu0 0
    %1288 = vmatpush1.bf16.msra.mxu0 0
    %1289 = vmatprep.subr.bf16.mxu0 0
    %1290 = vmatpush1.bf16.msra.mxu0 0
    %1291 = vmatprep.mubr.bf16.mxu0 0
    %1292 = vmatmul.mubr.bf16.gmra.mrb[0].mxu0 %v1204
    %v1293 = vpop.f32.mrb[0].mxu0
    %v1294 = vadd.f32 0.0, %v1293
    %v1295 = vpop.f32.mrb[0].mxu0
    %v1296 = vadd.f32 0.0, %v1295
    %v1297 = vpop.f32.mrb[0].mxu0
    %v1298 = vpop.f32.mrb[0].mxu0
    %1299 = vdwg.mxu0
    %v1300 = vadd.f32 %v1153, %v1253
    %v1301 = vadd.f32 %v1154, %v1255
    %v1302 = vadd.f32 %v1155, %v1294
    %v1303 = vadd.f32 %v1156, %v1296
    %v1304 = vld [vmem:[%s2] sm:$0xff]
    %1306 = vset.pattern.permute.xlu0 0
    %1307 = vperm.xlu0 %1306, %v1304
    %v1308 = vpop.permute.xlu0 %1307
    %v1310 = vadd.f32 %v1300, %v1308
    %v1311 = vadd.f32 %v1301, %v1308
    %v1312 = vadd.f32 %v1302, %v1308
    %v1313 = vadd.f32 %v1303, %v1308
    %1314 = vst [vmem:[#allocation2] sm:$0xff] %v1310
    %1315 = vst [vmem:[#allocation2 + $0x8] sm:$0xff] %v1311
    %1316 = vst [vmem:[#allocation2 + $0x10] sm:$0xff] %v1312
    %1317 = vst [vmem:[#allocation2 + $0x18] sm:$0xff] %v1313
    // Predicated region
    $region18: #{tpu_custom_call.1} parent=1 // pred_check
      _
    $region19: #{tpu_custom_call.1} parent=1 // pred_check_branch
      %1319 = sbr.rel (0) target = $region21
    $region20: #{tpu_custom_call.1} parent=1 // pred_region
      %s1321 = ssub.s32 512, 512
      %1322 = vsyncadd [#allocation3], %s1321
      %s1324 = sshll.u32 [#allocation2], 4
      %s1325 = int_to_ptr.vmem [resolvable:$true] %s1324
      %1327 = dma.vmem_to_hbm [thread:$0]  %s1325, 512, %s4, [#allocation3]
    $region21: #{tpu_custom_call.1} parent=1 // pred_fallthru
      _
    // Predicated region
    $region22: #{tpu_custom_call.1} parent=1 // pred_check
      _
    $region23: #{tpu_custom_call.1} parent=1 // pred_check_branch
      %1329 = sbr.rel (0) target = $region25
    $region24: #{tpu_custom_call.1} parent=1 // pred_region
      %1330 = dma.done [#allocation3], 512
    $region25: #{tpu_custom_call.1} parent=1 // pred_fallthru
      _
    %1331 = vsyncpa [#allocation3], 1

</llo_original>
